<compile_context>
chip_gen: v7x
topology: tpu7x:2x2x1
jax: 0.10.0
libtpu: 0.0.40
codegen_flags: <defaults>
</compile_context>

<pallas_src>
import math
from functools import partial

import jax
import jax.numpy as jnp
from jax.experimental import pallas as pl
from jax.experimental.pallas import tpu as pltpu


def fused_mha_kernel(x_ref, w_ref, b_ref, o_ref, *, num_heads, head_dim):
    """One batch element: fused QKV projection + multi-head attention.

    x_ref: (1, S, E) f32   w_ref: (E, 3H) bf16   b_ref: (1, 3H) f32
    o_ref: (1, S, H) f32
    """
    S = x_ref.shape[1]
    H = num_heads * head_dim

    # --- fused QKV projection: single MXU matmul with N = 3H, f32 accumulate ---
    x_bf = x_ref[0].astype(jnp.bfloat16)                       # (S, E)
    qkv = jnp.dot(x_bf, w_ref[...],
                  preferred_element_type=jnp.float32) + b_ref[...]   # (S, 3H) f32

    # Split heads with static slices + stack (robust lowering, no minor-dim reshape).
    def split_heads(t):                                        # (S, H) -> (nh, S, d)
        return jnp.stack(
            [t[:, h * head_dim:(h + 1) * head_dim] for h in range(num_heads)],
            axis=0)

    scale = 1.0 / math.sqrt(head_dim)
    q = split_heads(qkv[:, :H] * scale).astype(jnp.bfloat16)   # scale folded into Q
    k = split_heads(qkv[:, H:2 * H]).astype(jnp.bfloat16)
    v = split_heads(qkv[:, 2 * H:]).astype(jnp.bfloat16)

    # Scores: contract last dims directly (no explicit K transpose), f32 accumulate.
    scores = jnp.einsum("hqd,hkd->hqk", q, k,
                        preferred_element_type=jnp.float32)    # (nh, S, S)

    # TODO(synk): reference forward never applies a causal mask despite the class
    # name "MaskedSelfAttention"; we faithfully match the reference (no mask).
    m = jnp.max(scores, axis=-1, keepdims=True)
    p = jnp.exp(scores - m)                                    # f32 softmax math
    p = p * pl.reciprocal(jnp.sum(p, axis=-1, keepdims=True), approx=True)

    o = jnp.einsum("hqk,hkd->hqd", p.astype(jnp.bfloat16), v,
                   preferred_element_type=jnp.float32)         # (nh, S, d) f32

    # Merge heads -> lane-dense (S, H) store (no post-kernel transpose).
    o_ref[0] = jnp.concatenate(
        [o[h] for h in range(num_heads)], axis=-1).astype(o_ref.dtype)


def masked_self_attention(x, wq, bq, wk, bk, wv, bv, num_heads):
    B, S, E = x.shape
    H = wq.shape[1]
    d = H // num_heads

    # Concatenate projection weights/biases once (outside the kernel).
    w_qkv = jnp.concatenate([wq, wk, wv], axis=1).astype(jnp.bfloat16)  # (E, 3H)
    b_qkv = jnp.concatenate([bq, bk, bv], axis=1).astype(jnp.float32)   # (1, 3H)

    kernel = partial(fused_mha_kernel, num_heads=num_heads, head_dim=d)

    # TODO(synk): for large S (esp. v7x 64 MiB VMEM) switch to a flash-style
    # q-tile x kv-tile grid with online softmax instead of full (S,S) scores.
    return pl.pallas_call(
        kernel,
        out_shape=jax.ShapeDtypeStruct((B, S, H), jnp.float32),
        grid=(B,),
        in_specs=[
            pl.BlockSpec((1, S, E), lambda b: (b, 0, 0)),      # x: per-batch tile
            pl.BlockSpec((E, 3 * H), lambda b: (0, 0)),        # fused weights (resident)
            pl.BlockSpec((1, 3 * H), lambda b: (0, 0)),        # fused bias (resident)
        ],
        out_specs=pl.BlockSpec((1, S, H), lambda b: (b, 0, 0)),
        compiler_params=pltpu.CompilerParams(
            dimension_semantics=("parallel",)),                # batch shards across TCs
    )(x, w_qkv, b_qkv)


def reference(x, wq, bq, wk, bk, wv, bv, num_heads):
    """Pure-JAX f32 reference of the intended forward semantics."""
    B, S, E = x.shape
    H = wq.shape[1]
    d = H // num_heads

    def split(t):
        return t.reshape(B, S, num_heads, d).transpose(0, 2, 1, 3).reshape(
            B * num_heads, S, d)

    q = split(x @ wq + bq)
    k = split(x @ wk + bk)
    v = split(x @ wv + bv)
    scores = jnp.einsum("bqd,bkd->bqk", q, k) / math.sqrt(d)
    w = jax.nn.softmax(scores, axis=-1)
    o = jnp.einsum("bqk,bkd->bqd", w, v)
    return o.reshape(B, num_heads, S, d).transpose(0, 2, 1, 3).reshape(B, S, H)


if __name__ == "__main__":
    B, S, E, H, NUM_HEADS = 2, 8, 32, 32, 4

    key = jax.random.PRNGKey(0)
    kx, kq, kk, kv, kbq, kbk, kbv = jax.random.split(key, 7)

    x = jax.random.normal(kx, (B, S, E), dtype=jnp.float32)
    # nn.Linear(E, H): weight (H, E), bias (H); stored transposed as (E, H), (1, H).
    scale = 1.0 / math.sqrt(E)
    wq = jax.random.uniform(kq, (E, H), jnp.float32, -scale, scale)
    wk = jax.random.uniform(kk, (E, H), jnp.float32, -scale, scale)
    wv = jax.random.uniform(kv, (E, H), jnp.float32, -scale, scale)
    bq = jax.random.uniform(kbq, (1, H), jnp.float32, -scale, scale)
    bk = jax.random.uniform(kbk, (1, H), jnp.float32, -scale, scale)
    bv = jax.random.uniform(kbv, (1, H), jnp.float32, -scale, scale)

    out = masked_self_attention(x, wq, bq, wk, bk, wv, bv, NUM_HEADS)
    out = jax.block_until_ready(out)

    ref = reference(x, wq, bq, wk, bk, wv, bv, NUM_HEADS)
    assert out.shape == (B, S, H)
    # Tolerance relaxed vs the f32 reference because the MXU matmuls are fed
    # bf16 (f32 accumulation, f32 softmax statistics).
    assert jnp.allclose(out, ref, atol=2e-2, rtol=2e-2), "mismatch vs reference"

    print("KERNEL_OK")
</pallas_src>

<mosaic_0001>
module attributes {stable_mosaic.version = 11 : i64} {
  func.func @fused_mha_kernel(%arg0: i32, %arg1: memref<1x8x32xf32, #tpu.memory_space<vmem>>, %arg2: memref<32x96xbf16, #tpu.memory_space<vmem>>, %arg3: memref<1x96xf32, #tpu.memory_space<vmem>>, %arg4: memref<1x8x32xf32, #tpu.memory_space<vmem>>) attributes {dimension_semantics = [#tpu.dimension_semantics<parallel>], iteration_bounds = array<i64: 2>, scalar_prefetch = 0 : i64, scratch_operands = 0 : i64, tpu.core_type = #tpu.core_type<tc>, window_params = [{transform_indices = @transform_0, window_bounds = array<i64: 1, 8, 32>}, {pipeline_mode = #tpu.pipeline_mode<synchronous>, transform_indices = @transform_1, window_bounds = array<i64: 32, 96>}, {pipeline_mode = #tpu.pipeline_mode<synchronous>, transform_indices = @transform_2, window_bounds = array<i64: 1, 96>}, {transform_indices = @transform_3, window_bounds = array<i64: 1, 8, 32>}]} {
    %c0 = arith.constant 0 : index
    %c0_0 = arith.constant 0 : index
    %c0_1 = arith.constant 0 : index
    %0 = vector.load %arg1[%c0, %c0_0, %c0_1] : memref<1x8x32xf32, #tpu.memory_space<vmem>>, vector<1x8x32xf32>
    %1 = vector.shape_cast %0 : vector<1x8x32xf32> to vector<8x32xf32>
    %2 = arith.truncf %1 : vector<8x32xf32> to vector<8x32xbf16>
    %c0_2 = arith.constant 0 : index
    %c0_3 = arith.constant 0 : index
    %3 = vector.load %arg2[%c0_2, %c0_3] : memref<32x96xbf16, #tpu.memory_space<vmem>>, vector<32x96xbf16>
    %cst = arith.constant dense<0.000000e+00> : vector<8x96xf32>
    %4 = tpu.matmul %2, %3, %cst {dimension_numbers = #tpu.dot_dimension_numbers<[1], [0], [0], [1], [0, 0, 1, 1], [], []>} : vector<8x32xbf16>, vector<32x96xbf16>, vector<8x96xf32> -> vector<8x96xf32>
    %c0_4 = arith.constant 0 : index
    %c0_5 = arith.constant 0 : index
    %5 = vector.load %arg3[%c0_4, %c0_5] : memref<1x96xf32, #tpu.memory_space<vmem>>, vector<1x96xf32>
    %6 = vector.broadcast %5 : vector<1x96xf32> to vector<8x96xf32>
    %7 = arith.addf %4, %6 : vector<8x96xf32>
    %8 = vector.extract_strided_slice %7 {offsets = [0, 0], sizes = [8, 32], strides = [1, 1]} : vector<8x96xf32> to vector<8x32xf32>
    %cst_6 = arith.constant 0.353553385 : f32
    %9 = vector.broadcast %cst_6 : f32 to vector<8x32xf32>
    %10 = arith.mulf %8, %9 : vector<8x32xf32>
    %11 = vector.extract_strided_slice %10 {offsets = [0, 0], sizes = [8, 8], strides = [1, 1]} : vector<8x32xf32> to vector<8x8xf32>
    %12 = vector.extract_strided_slice %10 {offsets = [0, 8], sizes = [8, 8], strides = [1, 1]} : vector<8x32xf32> to vector<8x8xf32>
    %13 = vector.extract_strided_slice %10 {offsets = [0, 16], sizes = [8, 8], strides = [1, 1]} : vector<8x32xf32> to vector<8x8xf32>
    %14 = vector.extract_strided_slice %10 {offsets = [0, 24], sizes = [8, 8], strides = [1, 1]} : vector<8x32xf32> to vector<8x8xf32>
    %15 = vector.shape_cast %11 : vector<8x8xf32> to vector<1x8x8xf32>
    %16 = vector.shape_cast %12 : vector<8x8xf32> to vector<1x8x8xf32>
    %17 = vector.shape_cast %13 : vector<8x8xf32> to vector<1x8x8xf32>
    %18 = vector.shape_cast %14 : vector<8x8xf32> to vector<1x8x8xf32>
    %19 = tpu.concatenate %15, %16, %17, %18 in 0 : vector<1x8x8xf32>, vector<1x8x8xf32>, vector<1x8x8xf32>, vector<1x8x8xf32> -> vector<4x8x8xf32>
    %20 = arith.truncf %19 : vector<4x8x8xf32> to vector<4x8x8xbf16>
    %21 = vector.extract_strided_slice %7 {offsets = [0, 32], sizes = [8, 32], strides = [1, 1]} : vector<8x96xf32> to vector<8x32xf32>
    %22 = vector.extract_strided_slice %21 {offsets = [0, 0], sizes = [8, 8], strides = [1, 1]} : vector<8x32xf32> to vector<8x8xf32>
    %23 = vector.extract_strided_slice %21 {offsets = [0, 8], sizes = [8, 8], strides = [1, 1]} : vector<8x32xf32> to vector<8x8xf32>
    %24 = vector.extract_strided_slice %21 {offsets = [0, 16], sizes = [8, 8], strides = [1, 1]} : vector<8x32xf32> to vector<8x8xf32>
    %25 = vector.extract_strided_slice %21 {offsets = [0, 24], sizes = [8, 8], strides = [1, 1]} : vector<8x32xf32> to vector<8x8xf32>
    %26 = vector.shape_cast %22 : vector<8x8xf32> to vector<1x8x8xf32>
    %27 = vector.shape_cast %23 : vector<8x8xf32> to vector<1x8x8xf32>
    %28 = vector.shape_cast %24 : vector<8x8xf32> to vector<1x8x8xf32>
    %29 = vector.shape_cast %25 : vector<8x8xf32> to vector<1x8x8xf32>
    %30 = tpu.concatenate %26, %27, %28, %29 in 0 : vector<1x8x8xf32>, vector<1x8x8xf32>, vector<1x8x8xf32>, vector<1x8x8xf32> -> vector<4x8x8xf32>
    %31 = arith.truncf %30 : vector<4x8x8xf32> to vector<4x8x8xbf16>
    %32 = vector.extract_strided_slice %7 {offsets = [0, 64], sizes = [8, 32], strides = [1, 1]} : vector<8x96xf32> to vector<8x32xf32>
    %33 = vector.extract_strided_slice %32 {offsets = [0, 0], sizes = [8, 8], strides = [1, 1]} : vector<8x32xf32> to vector<8x8xf32>
    %34 = vector.extract_strided_slice %32 {offsets = [0, 8], sizes = [8, 8], strides = [1, 1]} : vector<8x32xf32> to vector<8x8xf32>
    %35 = vector.extract_strided_slice %32 {offsets = [0, 16], sizes = [8, 8], strides = [1, 1]} : vector<8x32xf32> to vector<8x8xf32>
    %36 = vector.extract_strided_slice %32 {offsets = [0, 24], sizes = [8, 8], strides = [1, 1]} : vector<8x32xf32> to vector<8x8xf32>
    %37 = vector.shape_cast %33 : vector<8x8xf32> to vector<1x8x8xf32>
    %38 = vector.shape_cast %34 : vector<8x8xf32> to vector<1x8x8xf32>
    %39 = vector.shape_cast %35 : vector<8x8xf32> to vector<1x8x8xf32>
    %40 = vector.shape_cast %36 : vector<8x8xf32> to vector<1x8x8xf32>
    %41 = tpu.concatenate %37, %38, %39, %40 in 0 : vector<1x8x8xf32>, vector<1x8x8xf32>, vector<1x8x8xf32>, vector<1x8x8xf32> -> vector<4x8x8xf32>
    %42 = arith.truncf %41 : vector<4x8x8xf32> to vector<4x8x8xbf16>
    "tpu.trace_start"() <{level = 10 : i32, message = "hqd,hkd->hqk"}> : () -> ()
    %cst_7 = arith.constant dense<0.000000e+00> : vector<4x8x8xf32>
    %43 = tpu.matmul %20, %31, %cst_7 {dimension_numbers = #tpu.dot_dimension_numbers<[2], [2], [1], [1], [0, 0, 0, 1, 1, 1], [0], [0]>} : vector<4x8x8xbf16>, vector<4x8x8xbf16>, vector<4x8x8xf32> -> vector<4x8x8xf32>
    "tpu.trace_stop"() : () -> ()
    %cst_8 = arith.constant dense<0xFF800000> : vector<4x8xf32>
    %44 = vector.multi_reduction <maximumf>, %43, %cst_8 [2] : vector<4x8x8xf32> to vector<4x8xf32>
    %45 = vector.shape_cast %44 : vector<4x8xf32> to vector<4x8x1xf32>
    %46 = vector.broadcast %45 : vector<4x8x1xf32> to vector<4x8x8xf32>
    %47 = arith.subf %43, %46 : vector<4x8x8xf32>
    %48 = math.exp %47 : vector<4x8x8xf32>
    %cst_9 = arith.constant dense<0.000000e+00> : vector<4x8xf32>
    %49 = vector.multi_reduction <add>, %48, %cst_9 [2] : vector<4x8x8xf32> to vector<4x8xf32>
    %50 = vector.shape_cast %49 : vector<4x8xf32> to vector<4x8x1xf32>
    %51 = tpu.reciprocal %50 {approx = true} : vector<4x8x1xf32> -> vector<4x8x1xf32>
    %52 = vector.broadcast %51 : vector<4x8x1xf32> to vector<4x8x8xf32>
    %53 = arith.mulf %48, %52 : vector<4x8x8xf32>
    %54 = arith.truncf %53 : vector<4x8x8xf32> to vector<4x8x8xbf16>
    "tpu.trace_start"() <{level = 10 : i32, message = "hqk,hkd->hqd"}> : () -> ()
    %cst_10 = arith.constant dense<0.000000e+00> : vector<4x8x8xf32>
    %55 = tpu.matmul %54, %42, %cst_10 {dimension_numbers = #tpu.dot_dimension_numbers<[2], [1], [1], [2], [0, 0, 0, 1, 1, 2], [0], [0]>} : vector<4x8x8xbf16>, vector<4x8x8xbf16>, vector<4x8x8xf32> -> vector<4x8x8xf32>
    "tpu.trace_stop"() : () -> ()
    %56 = vector.extract_strided_slice %55 {offsets = [0, 0, 0], sizes = [1, 8, 8], strides = [1, 1, 1]} : vector<4x8x8xf32> to vector<1x8x8xf32>
    %57 = vector.shape_cast %56 : vector<1x8x8xf32> to vector<8x8xf32>
    %58 = vector.extract_strided_slice %55 {offsets = [1, 0, 0], sizes = [1, 8, 8], strides = [1, 1, 1]} : vector<4x8x8xf32> to vector<1x8x8xf32>
    %59 = vector.shape_cast %58 : vector<1x8x8xf32> to vector<8x8xf32>
    %60 = vector.extract_strided_slice %55 {offsets = [2, 0, 0], sizes = [1, 8, 8], strides = [1, 1, 1]} : vector<4x8x8xf32> to vector<1x8x8xf32>
    %61 = vector.shape_cast %60 : vector<1x8x8xf32> to vector<8x8xf32>
    %62 = vector.extract_strided_slice %55 {offsets = [3, 0, 0], sizes = [1, 8, 8], strides = [1, 1, 1]} : vector<4x8x8xf32> to vector<1x8x8xf32>
    %63 = vector.shape_cast %62 : vector<1x8x8xf32> to vector<8x8xf32>
    %64 = tpu.concatenate %57, %59, %61, %63 in 1 : vector<8x8xf32>, vector<8x8xf32>, vector<8x8xf32>, vector<8x8xf32> -> vector<8x32xf32>
    %c0_11 = arith.constant 0 : index
    %c0_12 = arith.constant 0 : index
    %c0_13 = arith.constant 0 : index
    %65 = vector.load %arg4[%c0_11, %c0_12, %c0_13] : memref<1x8x32xf32, #tpu.memory_space<vmem>>, vector<1x8x32xf32>
    %66 = vector.shape_cast %65 : vector<1x8x32xf32> to vector<8x32xf32>
    %67 = vector.shape_cast %64 : vector<8x32xf32> to vector<1x8x32xf32>
    tpu.vector_store %arg4[%c0_11, %c0_12, %c0_13], %67 {strides = array<i32>} : memref<1x8x32xf32, #tpu.memory_space<vmem>>, vector<1x8x32xf32>,
    return
  }
  func.func @transform_0(%arg0: i32) -> (i32, i32, i32) {
    %c0_i32 = arith.constant 0 : i32
    %c0_i32_0 = arith.constant 0 : i32
    %c0_i32_1 = arith.constant 0 : i32
    return %arg0, %c0_i32, %c0_i32_0 : i32, i32, i32
  }
  func.func @transform_1(%arg0: i32) -> (i32, i32) {
    %c0_i32 = arith.constant 0 : i32
    %c0_i32_0 = arith.constant 0 : i32
    %c0_i32_1 = arith.constant 0 : i32
    return %c0_i32, %c0_i32_0 : i32, i32
  }
  func.func @transform_2(%arg0: i32) -> (i32, i32) {
    %c0_i32 = arith.constant 0 : i32
    %c0_i32_0 = arith.constant 0 : i32
    %c0_i32_1 = arith.constant 0 : i32
    return %c0_i32, %c0_i32_0 : i32, i32
  }
  func.func @transform_3(%arg0: i32) -> (i32, i32, i32) {
    %c0_i32 = arith.constant 0 : i32
    %c0_i32_0 = arith.constant 0 : i32
    %c0_i32_1 = arith.constant 0 : i32
    return %arg0, %c0_i32, %c0_i32_0 : i32, i32, i32
  }
}

</mosaic_0001>

<llo_original>
// kernel: tpu_custom_call.1
$region0: #{tpu_custom_call.1}
  #allocation0 [shape = 'u32[]', space=smem, size = 0x4, offset = 0x4, fixed_abs, tag = 'smem constant byte address 0x4 - core index']
  #allocation1 [shape = 'u32[144,128]{1,0:T(1,128)}', space=vmem, size = 0x12000, scoped, tag = 'internal scratch']
  %s0 = inlined_call_operand.hbm [shape: f32[2,8,32], index: 0, kind: input, shape index: {}]
  %s1 = inlined_call_operand.hbm [shape: bf16[32,96], index: 1, kind: input, shape index: {}]
  %s2 = inlined_call_operand.vmem [shape: f32[1,96], index: 2, kind: input, shape index: {}]
  %s3 = inlined_call_operand.hbm [shape: f32[2,8,32], index: 3, kind: output, shape index: {}]
  %s4 = sld [smem:[#allocation0]]
  $region53: #{tpu_custom_call.1} parent=0
    _
  %s6 = ssub.s32 1, %s4
  %s7 = scalar_select 0, %s6, %s4
  $region1: #{tpu_custom_call.1} parent=0
    #allocation2 [shape = 'u8[8192]{0}', space=vmem, size = 0x2000, scoped, tag = 'input window, operand 0']
    #allocation3 [shape = 's32[2]{0}', space=sflag, size = 0x8, scoped, tag = 'scoped memory for tpu_custom_call.1']
    #allocation4 [shape = 's32[2]{0}', space=sflag, size = 0x8, scoped, tag = 'scoped memory for tpu_custom_call.1']
    #allocation5 [shape = 'u8[8192]{0}', space=vmem, size = 0x2000, scoped, tag = 'input window, operand 1, single buffered']
    #allocation6 [shape = 's32[1]{0}', space=sflag, size = 0x4, scoped, tag = 'scoped memory for tpu_custom_call.1']
    #allocation7 [shape = 'u8[8192]{0}', space=vmem, size = 0x2000, scoped, tag = 'output window, operand 0']
    %8 = vsyncpa [#allocation3], 0
    %s9 = scalar_lea.sflag [#allocation3], 1
    %10 = vsyncpa %s9, 0
    %11 = vsyncpa [#allocation6], 0
    %12 = vsyncpa [#allocation4], 0
    %s13 = scalar_lea.sflag [#allocation4], 1
    %14 = vsyncpa %s13, 0
    loop: start=0, step=1, limit=4
    $region2: #{tpu_custom_call.1} parent=1 // loop_pre_header
      _
    $region3: #{tpu_custom_call.1} parent=1 // loop_header
      %s16 = sphi 0, %s20
      %p17 = scmp.ge.s32.totalorder %s16, 4
      %s26 = sphi 0, %s28
      %s29 = sphi 0, %s26
      %s30 = sphi 0, %s29
      %s46 = sphi 0, %s30
      %s50 = sphi 0, %s50
      %s52 = sphi 0, %s50
      %s53 = sphi 0, %s52
      %s67 = sphi 0, %s53
      %s71 = sphi 0, %s71
      %s73 = sphi 0, %s71
      %s74 = sphi 0, %s73
      %s88 = sphi 0, %s74
      %s94 = sphi 0, %s96
      %s97 = sphi 0, %s94
      %s98 = sphi 0, %s97
      %s114 = sphi 0, %s98
    $region4: #{tpu_custom_call.1} parent=1 // loop_header_branch
      %19 = sbr.rel (%p17) target = $region8
    $region5: #{tpu_custom_call.1} parent=1 // loop_body
      %s21 = ssub.s32 %s16, 1
      %s22 = ssub.s32 %s16, 2
      %s23 = sadd.s32 %s16, 1
      %s24 = ssub.s32 %s16, %s23
      %p25 = scmp.eq.s32.totalorder %s24, 0
      %s27 = sadd.s32 %s26, 1
      %s28 = scalar_select %p25, %s26, %s27
      %p31 = pneg %p25
      %p32 = scmp.eq.s32.totalorder %s16, 1
      %p33 = por %p31, %p32
      %p34 = scmp.ne.s32.totalorder %s26, %s29
      %p35 = scmp.eq.s32.totalorder %s16, 0
      %p36 = por %p34, %p35
      %p37 = scmp.ne.s32.totalorder %s26, %s29
      %p38 = scmp.eq.s32.totalorder %s21, 1
      %p39 = por %p37, %p38
      %p40 = scmp.ne.s32.totalorder %s29, %s30
      %p41 = scmp.eq.s32.totalorder %s21, 0
      %p42 = por %p40, %p41
      %p43 = scmp.ne.s32.totalorder %s29, %s30
      %p44 = scmp.eq.s32.totalorder %s22, 1
      %p45 = por %p43, %p44
      %p47 = scmp.ne.s32.totalorder %s30, %s46
      %p48 = scmp.eq.s32.totalorder %s22, 0
      %p49 = por %p47, %p48
      %s51 = sadd.s32 %s50, 1
      %p54 = scmp.eq.s32.totalorder %s16, 1
      %p55 = scmp.ne.s32.totalorder %s50, %s52
      %p56 = scmp.eq.s32.totalorder %s16, 0
      %p57 = por %p55, %p56
      %p58 = scmp.ne.s32.totalorder %s50, %s52
      %p59 = scmp.eq.s32.totalorder %s21, 1
      %p60 = por %p58, %p59
      %p61 = scmp.ne.s32.totalorder %s52, %s53
      %p62 = scmp.eq.s32.totalorder %s21, 0
      %p63 = por %p61, %p62
      %p64 = scmp.ne.s32.totalorder %s52, %s53
      %p65 = scmp.eq.s32.totalorder %s22, 1
      %p66 = por %p64, %p65
      %p68 = scmp.ne.s32.totalorder %s53, %s67
      %p69 = scmp.eq.s32.totalorder %s22, 0
      %p70 = por %p68, %p69
      %s72 = sadd.s32 %s71, 1
      %p75 = scmp.eq.s32.totalorder %s16, 1
      %p76 = scmp.ne.s32.totalorder %s71, %s73
      %p77 = scmp.eq.s32.totalorder %s16, 0
      %p78 = por %p76, %p77
      %p79 = scmp.ne.s32.totalorder %s71, %s73
      %p80 = scmp.eq.s32.totalorder %s21, 1
      %p81 = por %p79, %p80
      %p82 = scmp.ne.s32.totalorder %s73, %s74
      %p83 = scmp.eq.s32.totalorder %s21, 0
      %p84 = por %p82, %p83
      %p85 = scmp.ne.s32.totalorder %s73, %s74
      %p86 = scmp.eq.s32.totalorder %s22, 1
      %p87 = por %p85, %p86
      %p89 = scmp.ne.s32.totalorder %s74, %s88
      %p90 = scmp.eq.s32.totalorder %s22, 0
      %p91 = por %p89, %p90
      %s92 = ssub.s32 %s16, %s23
      %p93 = scmp.eq.s32.totalorder %s92, 0
      %s95 = sadd.s32 %s94, 1
      %s96 = scalar_select %p93, %s94, %s95
      %p99 = pneg %p93
      %p100 = scmp.eq.s32.totalorder %s16, 1
      %p101 = por %p99, %p100
      %p102 = scmp.ne.s32.totalorder %s94, %s97
      %p103 = scmp.eq.s32.totalorder %s16, 0
      %p104 = por %p102, %p103
      %p105 = scmp.ne.s32.totalorder %s94, %s97
      %p106 = scmp.eq.s32.totalorder %s21, 1
      %p107 = por %p105, %p106
      %p108 = scmp.ne.s32.totalorder %s97, %s98
      %p109 = scmp.eq.s32.totalorder %s21, 0
      %p110 = por %p108, %p109
      %p111 = scmp.ne.s32.totalorder %s97, %s98
      %p112 = scmp.eq.s32.totalorder %s22, 1
      %p113 = por %p111, %p112
      %p115 = scmp.ne.s32.totalorder %s98, %s114
      %p116 = scmp.eq.s32.totalorder %s22, 0
      %p117 = por %p115, %p116
      %p118 = scmp.le.s32.totalorder 1, %s16
      %p119 = scmp.lt.s32.totalorder %s16, 3
      %p120 = pnand %p118, %p119
      %p121 = pneg %p120
      // Predicated region
      $region9: #{tpu_custom_call.1} parent=5 // pred_check
        _
      $region10: #{tpu_custom_call.1} parent=5 // pred_check_branch
        %123 = sbr.rel (%p120) target = $region12
      $region11: #{tpu_custom_call.1} parent=5 // pred_region
        %s124 = ssub.s32 %s16, 1
        // Predicated region
        $region13: #{tpu_custom_call.1} parent=11 // pred_check
          %p125 = pneg %p63
        $region14: #{tpu_custom_call.1} parent=11 // pred_check_branch
          %127 = sbr.rel (%p125) target = $region16
        $region15: #{tpu_custom_call.1} parent=11 // pred_region
          %s129 = ssub.s32 256, 256
          %130 = vsyncadd [#allocation6], %s129
          %s131 = sshll.u32 [#allocation5], 4
          %s132 = int_to_ptr.vmem [resolvable:$true] %s131
          %137 = dma.hbm_to_vmem [thread:$0]  %s1, 256, %s132, [#allocation6], 64, 64, 4
        $region16: #{tpu_custom_call.1} parent=11 // pred_fallthru
          _
        // Predicated region
        $region17: #{tpu_custom_call.1} parent=11 // pred_check
          %p138 = pneg %p84
        $region18: #{tpu_custom_call.1} parent=11 // pred_check_branch
          %140 = sbr.rel (%p138) target = $region20
        $region19: #{tpu_custom_call.1} parent=11 // pred_region
          _
        $region20: #{tpu_custom_call.1} parent=11 // pred_fallthru
          _
      $region12: #{tpu_custom_call.1} parent=5 // pred_fallthru
        _
      %p141 = scmp.lt.s32.totalorder %s16, 2
      // Predicated region
      $region21: #{tpu_custom_call.1} parent=5 // pred_check
        %p142 = pneg %p141
      $region22: #{tpu_custom_call.1} parent=5 // pred_check_branch
        %144 = sbr.rel (%p142) target = $region24
      $region23: #{tpu_custom_call.1} parent=5 // pred_region
        // Predicated region
        $region25: #{tpu_custom_call.1} parent=23 // pred_check
          %p145 = pneg %p36
        $region26: #{tpu_custom_call.1} parent=23 // pred_check_branch
          %147 = sbr.rel (%p145) target = $region28
        $region27: #{tpu_custom_call.1} parent=23 // pred_region
          %s148 = sand.u32 %s26, 1
          %s149 = scalar_lea.sflag [#allocation3], %s148
          %s150 = sand.u32 %s26, 1
          %s151 = smul.addr %s150, 8
          %s152 = scalar_lea.vmem [#allocation2], %s151
          %s154 = ssub.s32 128, 128
          %155 = vsyncadd %s149, %s154
          %s156 = smul.addr %s16, 128
          %s157 = scalar_lea.hbm %s0, %s156
          %s159 = sshll.u32 %s152, 4
          %s160 = int_to_ptr.vmem [resolvable:$true] %s159
          %162 = dma.hbm_to_vmem [thread:$0]  %s157, 128, %s160, %s149
        $region28: #{tpu_custom_call.1} parent=23 // pred_fallthru
          _
      $region24: #{tpu_custom_call.1} parent=5 // pred_fallthru
        _
      %p163 = scmp.le.s32.totalorder 1, %s16
      %p164 = scmp.lt.s32.totalorder %s16, 3
      %p165 = pnand %p163, %p164
      %p166 = pneg %p165
      // Predicated region
      $region29: #{tpu_custom_call.1} parent=5 // pred_check
        _
      $region30: #{tpu_custom_call.1} parent=5 // pred_check_branch
        %168 = sbr.rel (%p165) target = $region32
      $region31: #{tpu_custom_call.1} parent=5 // pred_region
        %s169 = ssub.s32 %s16, 1
        %s170 = sand.u32 %s29, 1
        %s171 = scalar_lea.sflag [#allocation3], %s170
        %s172 = sand.u32 %s29, 1
        %s173 = smul.addr %s172, 8
        %s174 = scalar_lea.vmem [#allocation2], %s173
        // Predicated region
        $region33: #{tpu_custom_call.1} parent=31 // pred_check
          %p175 = pneg %p42
        $region34: #{tpu_custom_call.1} parent=31 // pred_check_branch
          %177 = sbr.rel (%p175) target = $region36
        $region35: #{tpu_custom_call.1} parent=31 // pred_region
          %178 = dma.done %s171, 128
        $region36: #{tpu_custom_call.1} parent=31 // pred_fallthru
          _
        // Predicated region
        $region37: #{tpu_custom_call.1} parent=31 // pred_check
          %p179 = pneg %p63
        $region38: #{tpu_custom_call.1} parent=31 // pred_check_branch
          %181 = sbr.rel (%p179) target = $region40
        $region39: #{tpu_custom_call.1} parent=31 // pred_region
          %182 = dma.done [#allocation6], 256
        $region40: #{tpu_custom_call.1} parent=31 // pred_fallthru
          _
        %s183 = sand.u32 %s29, 1
        %s184 = scalar_lea.sflag [#allocation3], %s183
        %s185 = sand.u32 %s29, 1
        %s186 = smul.addr %s185, 8
        %s187 = scalar_lea.vmem [#allocation2], %s186
        %p188 = pneg %p42
        %p189 = pneg %p39
        %p190 = pneg %p63
        %p191 = pneg %p60
        %p192 = pneg %p84
        %p193 = pneg %p81
        %p194 = pneg %p110
        %p195 = pneg %p107
        %s196 = sand.u32 %s97, 1
        %s197 = scalar_lea.sflag [#allocation4], %s196
        %s198 = sand.u32 %s97, 1
        %s199 = smul.addr %s198, 8
        %s200 = scalar_lea.vmem [#allocation7], %s199
        %v202 = vld [vmem:[%s174] sm:$0xff]
        %v203 = vpack.c.bf16 %v202, %v202
        %v204 = vld [vmem:[#allocation5] sm:$0xf]
        %v205 = vld [vmem:[#allocation5 + $0x4] sm:$0xf]
        %v206 = vld [vmem:[#allocation5 + $0x8] sm:$0xf]
        %v207 = vld [vmem:[#allocation5 + $0xc] sm:$0xf]
        %v208 = vld [vmem:[%s2] sm:$0x1]
        %v210 = vlaneseq
        %v211 = vshrl.u32 %v210, 7
        %v212 = vsub.s32 0, %v211
        %v213 = vrot.slane %v208, %v212
        %v219 = vunpack.c.l.b16 %v204
        %v220 = vunpack.c.l.b16 %v205
        %v221 = vunpack.c.l.b16 %v206
        %v222 = vunpack.c.l.b16 %v207
        %v223 = vpack.c.b16 %v220, %v219
        %v224 = vpack.c.b16 %v222, %v221
        %vm227 = vcmask 261120
        %v229 = vsel %vm227, %v203, 0
        %231 = vmatprep.subr.bf16.mxu0 0
        %232 = vmatpush1.bf16.msra.mxu0 %v223
        %233 = vmatprep.subr.bf16.mxu0 0
        %234 = vmatpush1.bf16.msra.mxu0 %v224
        %235 = vmatprep.subr.bf16.mxu0 0
        %236 = vmatpush1.bf16.msra.mxu0 0
        %237 = vmatprep.subr.bf16.mxu0 0
        %238 = vmatpush1.bf16.msra.mxu0 0
        %239 = vmatprep.subr.bf16.mxu0 0
        %240 = vmatpush1.bf16.msra.mxu0 0
        %241 = vmatprep.subr.bf16.mxu0 0
        %242 = vmatpush1.bf16.msra.mxu0 0
        %243 = vmatprep.subr.bf16.mxu0 0
        %244 = vmatpush1.bf16.msra.mxu0 0
        %245 = vmatprep.subr.bf16.mxu0 0
        %246 = vmatpush1.bf16.msra.mxu0 0
        %247 = vmatprep.subr.bf16.mxu0 0
        %248 = vmatpush1.bf16.msra.mxu0 0
        %249 = vmatprep.subr.bf16.mxu0 0
        %250 = vmatpush1.bf16.msra.mxu0 0
        %251 = vmatprep.subr.bf16.mxu0 0
        %252 = vmatpush1.bf16.msra.mxu0 0
        %253 = vmatprep.subr.bf16.mxu0 0
        %254 = vmatpush1.bf16.msra.mxu0 0
        %255 = vmatprep.subr.bf16.mxu0 0
        %256 = vmatpush1.bf16.msra.mxu0 0
        %257 = vmatprep.subr.bf16.mxu0 0
        %258 = vmatpush1.bf16.msra.mxu0 0
        %259 = vmatprep.subr.bf16.mxu0 0
        %260 = vmatpush1.bf16.msra.mxu0 0
        %261 = vmatprep.subr.bf16.mxu0 0
        %262 = vmatpush1.bf16.msra.mxu0 0
        %263 = vmatprep.mubr.bf16.mxu0 0
        %264 = vmatmul.mubr.bf16.gmra.mrb[0].mxu0 %v229
        %v265 = vpop.f32.mrb[0].mxu0
        %v266 = vadd.f32 %v213, %v265
        %v267 = vpop.f32.mrb[0].mxu0
        %v268 = vpop.f32.mrb[0].mxu0
        %v269 = vpop.f32.mrb[0].mxu0
        %270 = vdwg.mxu0
        %v271 = vmul.f32 %v266, 0.35355338
        %273 = vrot.lane.b32.xlu0 %v271, 120
        %v274 = vpop.permute.xlu0 %273
        %276 = vrot.lane.b32.xlu0 %v271, 112
        %v277 = vpop.permute.xlu0 %276
        %279 = vrot.lane.b32.xlu0 %v271, 104
        %v280 = vpop.permute.xlu0 %279
        %v282 = vpack.c.bf16 %v271, %v271
        %v283 = vpack.c.bf16 %v274, %v274
        %v284 = vpack.c.bf16 %v277, %v277
        %v285 = vpack.c.bf16 %v280, %v280
        %287 = vrot.lane.b32.xlu0 %v266, 120
        %v288 = vpop.permute.xlu0 %287
        %290 = vrot.lane.b32.xlu0 %v266, 112
        %v291 = vpop.permute.xlu0 %290
        %293 = vrot.lane.b32.xlu0 %v266, 104
        %v294 = vpop.permute.xlu0 %293
        %v296 = vpack.c.bf16 %v266, %v266
        %v297 = vpack.c.bf16 %v288, %v288
        %v298 = vpack.c.bf16 %v291, %v291
        %v299 = vpack.c.bf16 %v294, %v294
        %301 = vrot.lane.b32.xlu0 %v296, 96
        %v302 = vpop.permute.xlu0 %301
        %vm303 = vcmask 64512
        %v305 = vsel %vm303, %v282, 0
        %v308 = vsel %vm303, %v302, 0
        %310 = vmatprep.subr.bf16.mxu0 0
        %311 = vmatpush1.bf16.xpose.msra.mxu0 %v308
        %312 = vmatprep.subr.bf16.mxu0 0
        %313 = vmatpush1.bf16.xpose.msra.mxu0 0
        %314 = vmatprep.subr.bf16.mxu0 0
        %315 = vmatpush1.bf16.xpose.msra.mxu0 0
        %316 = vmatprep.subr.bf16.mxu0 0
        %317 = vmatpush1.bf16.xpose.msra.mxu0 0
        %318 = vmatprep.subr.bf16.mxu0 0
        %319 = vmatpush1.bf16.xpose.msra.mxu0 0
        %320 = vmatprep.subr.bf16.mxu0 0
        %321 = vmatpush1.bf16.xpose.msra.mxu0 0
        %322 = vmatprep.subr.bf16.mxu0 0
        %323 = vmatpush1.bf16.xpose.msra.mxu0 0
        %324 = vmatprep.subr.bf16.mxu0 0
        %325 = vmatpush1.bf16.xpose.msra.mxu0 0
        %326 = vmatprep.subr.bf16.mxu0 0
        %327 = vmatpush1.bf16.xpose.msra.mxu0 0
        %328 = vmatprep.subr.bf16.mxu0 0
        %329 = vmatpush1.bf16.xpose.msra.mxu0 0
        %330 = vmatprep.subr.bf16.mxu0 0
        %331 = vmatpush1.bf16.xpose.msra.mxu0 0
        %332 = vmatprep.subr.bf16.mxu0 0
        %333 = vmatpush1.bf16.xpose.msra.mxu0 0
        %334 = vmatprep.subr.bf16.mxu0 0
        %335 = vmatpush1.bf16.xpose.msra.mxu0 0
        %336 = vmatprep.subr.bf16.mxu0 0
        %337 = vmatpush1.bf16.xpose.msra.mxu0 0
        %338 = vmatprep.subr.bf16.mxu0 0
        %339 = vmatpush1.bf16.xpose.msra.mxu0 0
        %340 = vmatprep.subr.bf16.mxu0 0
        %341 = vmatpush1.bf16.xpose.msra.mxu0 0
        %342 = vmatprep.mubr.bf16.mxu0 0
        %343 = vmatmul.mubr.bf16.gmra.mrb[0].mxu0 %v305
        %v344 = vpop.f32.mrb[0].mxu0
        %v345 = vadd.f32 0.0, %v344
        %v346 = vpop.f32.mrb[0].mxu0
        %v347 = vpop.f32.mrb[0].mxu0
        %v348 = vpop.f32.mrb[0].mxu0
        %349 = vdwg.mxu0
        %351 = vrot.lane.b32.xlu0 %v297, 96
        %v352 = vpop.permute.xlu0 %351
        %v354 = vsel %vm303, %v283, 0
        %v357 = vsel %vm303, %v352, 0
        %359 = vmatprep.subr.bf16.mxu0 0
        %360 = vmatpush1.bf16.xpose.msra.mxu0 %v357
        %361 = vmatprep.subr.bf16.mxu0 0
        %362 = vmatpush1.bf16.xpose.msra.mxu0 0
        %363 = vmatprep.subr.bf16.mxu0 0
        %364 = vmatpush1.bf16.xpose.msra.mxu0 0
        %365 = vmatprep.subr.bf16.mxu0 0
        %366 = vmatpush1.bf16.xpose.msra.mxu0 0
        %367 = vmatprep.subr.bf16.mxu0 0
        %368 = vmatpush1.bf16.xpose.msra.mxu0 0
        %369 = vmatprep.subr.bf16.mxu0 0
        %370 = vmatpush1.bf16.xpose.msra.mxu0 0
        %371 = vmatprep.subr.bf16.mxu0 0
        %372 = vmatpush1.bf16.xpose.msra.mxu0 0
        %373 = vmatprep.subr.bf16.mxu0 0
        %374 = vmatpush1.bf16.xpose.msra.mxu0 0
        %375 = vmatprep.subr.bf16.mxu0 0
        %376 = vmatpush1.bf16.xpose.msra.mxu0 0
        %377 = vmatprep.subr.bf16.mxu0 0
        %378 = vmatpush1.bf16.xpose.msra.mxu0 0
        %379 = vmatprep.subr.bf16.mxu0 0
        %380 = vmatpush1.bf16.xpose.msra.mxu0 0
        %381 = vmatprep.subr.bf16.mxu0 0
        %382 = vmatpush1.bf16.xpose.msra.mxu0 0
        %383 = vmatprep.subr.bf16.mxu0 0
        %384 = vmatpush1.bf16.xpose.msra.mxu0 0
        %385 = vmatprep.subr.bf16.mxu0 0
        %386 = vmatpush1.bf16.xpose.msra.mxu0 0
        %387 = vmatprep.subr.bf16.mxu0 0
        %388 = vmatpush1.bf16.xpose.msra.mxu0 0
        %389 = vmatprep.subr.bf16.mxu0 0
        %390 = vmatpush1.bf16.xpose.msra.mxu0 0
        %391 = vmatprep.mubr.bf16.mxu0 0
        %392 = vmatmul.mubr.bf16.gmra.mrb[0].mxu0 %v354
        %v393 = vpop.f32.mrb[0].mxu0
        %v394 = vadd.f32 0.0, %v393
        %v395 = vpop.f32.mrb[0].mxu0
        %v396 = vpop.f32.mrb[0].mxu0
        %v397 = vpop.f32.mrb[0].mxu0
        %398 = vdwg.mxu0
        %400 = vrot.lane.b32.xlu0 %v298, 96
        %v401 = vpop.permute.xlu0 %400
        %v403 = vsel %vm303, %v284, 0
        %v406 = vsel %vm303, %v401, 0
        %408 = vmatprep.subr.bf16.mxu0 0
        %409 = vmatpush1.bf16.xpose.msra.mxu0 %v406
        %410 = vmatprep.subr.bf16.mxu0 0
        %411 = vmatpush1.bf16.xpose.msra.mxu0 0
        %412 = vmatprep.subr.bf16.mxu0 0
        %413 = vmatpush1.bf16.xpose.msra.mxu0 0
        %414 = vmatprep.subr.bf16.mxu0 0
        %415 = vmatpush1.bf16.xpose.msra.mxu0 0
        %416 = vmatprep.subr.bf16.mxu0 0
        %417 = vmatpush1.bf16.xpose.msra.mxu0 0
        %418 = vmatprep.subr.bf16.mxu0 0
        %419 = vmatpush1.bf16.xpose.msra.mxu0 0
        %420 = vmatprep.subr.bf16.mxu0 0
        %421 = vmatpush1.bf16.xpose.msra.mxu0 0
        %422 = vmatprep.subr.bf16.mxu0 0
        %423 = vmatpush1.bf16.xpose.msra.mxu0 0
        %424 = vmatprep.subr.bf16.mxu0 0
        %425 = vmatpush1.bf16.xpose.msra.mxu0 0
        %426 = vmatprep.subr.bf16.mxu0 0
        %427 = vmatpush1.bf16.xpose.msra.mxu0 0
        %428 = vmatprep.subr.bf16.mxu0 0
        %429 = vmatpush1.bf16.xpose.msra.mxu0 0
        %430 = vmatprep.subr.bf16.mxu0 0
        %431 = vmatpush1.bf16.xpose.msra.mxu0 0
        %432 = vmatprep.subr.bf16.mxu0 0
        %433 = vmatpush1.bf16.xpose.msra.mxu0 0
        %434 = vmatprep.subr.bf16.mxu0 0
        %435 = vmatpush1.bf16.xpose.msra.mxu0 0
        %436 = vmatprep.subr.bf16.mxu0 0
        %437 = vmatpush1.bf16.xpose.msra.mxu0 0
        %438 = vmatprep.subr.bf16.mxu0 0
        %439 = vmatpush1.bf16.xpose.msra.mxu0 0
        %440 = vmatprep.mubr.bf16.mxu0 0
        %441 = vmatmul.mubr.bf16.gmra.mrb[0].mxu0 %v403
        %v442 = vpop.f32.mrb[0].mxu0
        %v443 = vadd.f32 0.0, %v442
        %v444 = vpop.f32.mrb[0].mxu0
        %v445 = vpop.f32.mrb[0].mxu0
        %v446 = vpop.f32.mrb[0].mxu0
        %447 = vdwg.mxu0
        %449 = vrot.lane.b32.xlu0 %v299, 96
        %v450 = vpop.permute.xlu0 %449
        %v452 = vsel %vm303, %v285, 0
        %v455 = vsel %vm303, %v450, 0
        %457 = vmatprep.subr.bf16.mxu0 0
        %458 = vmatpush1.bf16.xpose.msra.mxu0 %v455
        %459 = vmatprep.subr.bf16.mxu0 0
        %460 = vmatpush1.bf16.xpose.msra.mxu0 0
        %461 = vmatprep.subr.bf16.mxu0 0
        %462 = vmatpush1.bf16.xpose.msra.mxu0 0
        %463 = vmatprep.subr.bf16.mxu0 0
        %464 = vmatpush1.bf16.xpose.msra.mxu0 0
        %465 = vmatprep.subr.bf16.mxu0 0
        %466 = vmatpush1.bf16.xpose.msra.mxu0 0
        %467 = vmatprep.subr.bf16.mxu0 0
        %468 = vmatpush1.bf16.xpose.msra.mxu0 0
        %469 = vmatprep.subr.bf16.mxu0 0
        %470 = vmatpush1.bf16.xpose.msra.mxu0 0
        %471 = vmatprep.subr.bf16.mxu0 0
        %472 = vmatpush1.bf16.xpose.msra.mxu0 0
        %473 = vmatprep.subr.bf16.mxu0 0
        %474 = vmatpush1.bf16.xpose.msra.mxu0 0
        %475 = vmatprep.subr.bf16.mxu0 0
        %476 = vmatpush1.bf16.xpose.msra.mxu0 0
        %477 = vmatprep.subr.bf16.mxu0 0
        %478 = vmatpush1.bf16.xpose.msra.mxu0 0
        %479 = vmatprep.subr.bf16.mxu0 0
        %480 = vmatpush1.bf16.xpose.msra.mxu0 0
        %481 = vmatprep.subr.bf16.mxu0 0
        %482 = vmatpush1.bf16.xpose.msra.mxu0 0
        %483 = vmatprep.subr.bf16.mxu0 0
        %484 = vmatpush1.bf16.xpose.msra.mxu0 0
        %485 = vmatprep.subr.bf16.mxu0 0
        %486 = vmatpush1.bf16.xpose.msra.mxu0 0
        %487 = vmatprep.subr.bf16.mxu0 0
        %488 = vmatpush1.bf16.xpose.msra.mxu0 0
        %489 = vmatprep.mubr.bf16.mxu0 0
        %490 = vmatmul.mubr.bf16.gmra.mrb[0].mxu0 %v452
        %v491 = vpop.f32.mrb[0].mxu0
        %v492 = vadd.f32 0.0, %v491
        %v493 = vpop.f32.mrb[0].mxu0
        %v494 = vpop.f32.mrb[0].mxu0
        %v495 = vpop.f32.mrb[0].mxu0
        %496 = vdwg.mxu0
        %v497 = vsel %vm303, %v345, -inf
        %498 = vmax.xlane.f32.xlu0 %v497
        %v499 = vpop.xlane.xlu0 %498
        %v500 = vsel %vm303, %v394, -inf
        %501 = vmax.xlane.f32.xlu0 %v500
        %v502 = vpop.xlane.xlu0 %501
        %v503 = vsel %vm303, %v443, -inf
        %504 = vmax.xlane.f32.xlu0 %v503
        %v505 = vpop.xlane.xlu0 %504
        %v506 = vsel %vm303, %v492, -inf
        %507 = vmax.xlane.f32.xlu0 %v506
        %v508 = vpop.xlane.xlu0 %507
        %v509 = vsub.f32 %v345, %v499
        %v510 = vsub.f32 %v394, %v502
        %v511 = vsub.f32 %v443, %v505
        %v512 = vsub.f32 %v492, %v508
        %v513 = vmul.f32 %v509, 1.442695
        %v514 = vpow.pop %v513
        %v515 = vmul.f32 %v510, 1.442695
        %v516 = vpow.pop %v515
        %v517 = vmul.f32 %v511, 1.442695
        %v518 = vpow.pop %v517
        %v519 = vmul.f32 %v512, 1.442695
        %v520 = vpow.pop %v519
        %v521 = vsel %vm303, %v514, 0.0
        %522 = vadd.xlane.f32.xlu0 %v521
        %v523 = vpop.xlane.xlu0 %522
        %v524 = vsel %vm303, %v516, 0.0
        %525 = vadd.xlane.f32.xlu0 %v524
        %v526 = vpop.xlane.xlu0 %525
        %v527 = vsel %vm303, %v518, 0.0
        %528 = vadd.xlane.f32.xlu0 %v527
        %v529 = vpop.xlane.xlu0 %528
        %v530 = vsel %vm303, %v520, 0.0
        %531 = vadd.xlane.f32.xlu0 %v530
        %v532 = vpop.xlane.xlu0 %531
        %v533 = vrcp.pop %v523
        %v534 = vrcp.pop %v526
        %v535 = vrcp.pop %v529
        %v536 = vrcp.pop %v532
        %v537 = vmul.f32 %v514, %v533
        %v538 = vmul.f32 %v516, %v534
        %v539 = vmul.f32 %v518, %v535
        %v540 = vmul.f32 %v520, %v536
        %v541 = vpack.c.bf16 %v537, %v537
        %v542 = vpack.c.bf16 %v538, %v538
        %v543 = vpack.c.bf16 %v539, %v539
        %v544 = vpack.c.bf16 %v540, %v540
        %545 = vrot.lane.b32.xlu0 %v296, 64
        %v546 = vpop.permute.xlu0 %545
        %v548 = vsel %vm303, %v541, 0
        %vm550 = vcmask 1043456
        %v552 = vsel %vm550, %v546, 0
        %554 = vmatprep.subr.bf16.mxu0 0
        %555 = vmatpush1.bf16.msra.mxu0 %v552
        %556 = vmatprep.subr.bf16.mxu0 0
        %557 = vmatpush1.bf16.msra.mxu0 0
        %558 = vmatprep.subr.bf16.mxu0 0
        %559 = vmatpush1.bf16.msra.mxu0 0
        %560 = vmatprep.subr.bf16.mxu0 0
        %561 = vmatpush1.bf16.msra.mxu0 0
        %562 = vmatprep.subr.bf16.mxu0 0
        %563 = vmatpush1.bf16.msra.mxu0 0
        %564 = vmatprep.subr.bf16.mxu0 0
        %565 = vmatpush1.bf16.msra.mxu0 0
        %566 = vmatprep.subr.bf16.mxu0 0
        %567 = vmatpush1.bf16.msra.mxu0 0
        %568 = vmatprep.subr.bf16.mxu0 0
        %569 = vmatpush1.bf16.msra.mxu0 0
        %570 = vmatprep.subr.bf16.mxu0 0
        %571 = vmatpush1.bf16.msra.mxu0 0
        %572 = vmatprep.subr.bf16.mxu0 0
        %573 = vmatpush1.bf16.msra.mxu0 0
        %574 = vmatprep.subr.bf16.mxu0 0
        %575 = vmatpush1.bf16.msra.mxu0 0
        %576 = vmatprep.subr.bf16.mxu0 0
        %577 = vmatpush1.bf16.msra.mxu0 0
        %578 = vmatprep.subr.bf16.mxu0 0
        %579 = vmatpush1.bf16.msra.mxu0 0
        %580 = vmatprep.subr.bf16.mxu0 0
        %581 = vmatpush1.bf16.msra.mxu0 0
        %582 = vmatprep.subr.bf16.mxu0 0
        %583 = vmatpush1.bf16.msra.mxu0 0
        %584 = vmatprep.subr.bf16.mxu0 0
        %585 = vmatpush1.bf16.msra.mxu0 0
        %586 = vmatprep.mubr.bf16.mxu0 0
        %587 = vmatmul.mubr.bf16.gmra.mrb[0].mxu0 %v548
        %v588 = vpop.f32.mrb[0].mxu0
        %v589 = vadd.f32 0.0, %v588
        %v590 = vpop.f32.mrb[0].mxu0
        %v591 = vpop.f32.mrb[0].mxu0
        %v592 = vpop.f32.mrb[0].mxu0
        %593 = vdwg.mxu0
        %594 = vrot.lane.b32.xlu0 %v297, 64
        %v595 = vpop.permute.xlu0 %594
        %v597 = vsel %vm303, %v542, 0
        %v600 = vsel %vm550, %v595, 0
        %602 = vmatprep.subr.bf16.mxu0 0
        %603 = vmatpush1.bf16.msra.mxu0 %v600
        %604 = vmatprep.subr.bf16.mxu0 0
        %605 = vmatpush1.bf16.msra.mxu0 0
        %606 = vmatprep.subr.bf16.mxu0 0
        %607 = vmatpush1.bf16.msra.mxu0 0
        %608 = vmatprep.subr.bf16.mxu0 0
        %609 = vmatpush1.bf16.msra.mxu0 0
        %610 = vmatprep.subr.bf16.mxu0 0
        %611 = vmatpush1.bf16.msra.mxu0 0
        %612 = vmatprep.subr.bf16.mxu0 0
        %613 = vmatpush1.bf16.msra.mxu0 0
        %614 = vmatprep.subr.bf16.mxu0 0
        %615 = vmatpush1.bf16.msra.mxu0 0
        %616 = vmatprep.subr.bf16.mxu0 0
        %617 = vmatpush1.bf16.msra.mxu0 0
        %618 = vmatprep.subr.bf16.mxu0 0
        %619 = vmatpush1.bf16.msra.mxu0 0
        %620 = vmatprep.subr.bf16.mxu0 0
        %621 = vmatpush1.bf16.msra.mxu0 0
        %622 = vmatprep.subr.bf16.mxu0 0
        %623 = vmatpush1.bf16.msra.mxu0 0
        %624 = vmatprep.subr.bf16.mxu0 0
        %625 = vmatpush1.bf16.msra.mxu0 0
        %626 = vmatprep.subr.bf16.mxu0 0
        %627 = vmatpush1.bf16.msra.mxu0 0
        %628 = vmatprep.subr.bf16.mxu0 0
        %629 = vmatpush1.bf16.msra.mxu0 0
        %630 = vmatprep.subr.bf16.mxu0 0
        %631 = vmatpush1.bf16.msra.mxu0 0
        %632 = vmatprep.subr.bf16.mxu0 0
        %633 = vmatpush1.bf16.msra.mxu0 0
        %634 = vmatprep.mubr.bf16.mxu0 0
        %635 = vmatmul.mubr.bf16.gmra.mrb[0].mxu0 %v597
        %v636 = vpop.f32.mrb[0].mxu0
        %v637 = vadd.f32 0.0, %v636
        %v638 = vpop.f32.mrb[0].mxu0
        %v639 = vpop.f32.mrb[0].mxu0
        %v640 = vpop.f32.mrb[0].mxu0
        %641 = vdwg.mxu0
        %642 = vrot.lane.b32.xlu0 %v298, 64
        %v643 = vpop.permute.xlu0 %642
        %v645 = vsel %vm303, %v543, 0
        %v648 = vsel %vm550, %v643, 0
        %650 = vmatprep.subr.bf16.mxu0 0
        %651 = vmatpush1.bf16.msra.mxu0 %v648
        %652 = vmatprep.subr.bf16.mxu0 0
        %653 = vmatpush1.bf16.msra.mxu0 0
        %654 = vmatprep.subr.bf16.mxu0 0
        %655 = vmatpush1.bf16.msra.mxu0 0
        %656 = vmatprep.subr.bf16.mxu0 0
        %657 = vmatpush1.bf16.msra.mxu0 0
        %658 = vmatprep.subr.bf16.mxu0 0
        %659 = vmatpush1.bf16.msra.mxu0 0
        %660 = vmatprep.subr.bf16.mxu0 0
        %661 = vmatpush1.bf16.msra.mxu0 0
        %662 = vmatprep.subr.bf16.mxu0 0
        %663 = vmatpush1.bf16.msra.mxu0 0
        %664 = vmatprep.subr.bf16.mxu0 0
        %665 = vmatpush1.bf16.msra.mxu0 0
        %666 = vmatprep.subr.bf16.mxu0 0
        %667 = vmatpush1.bf16.msra.mxu0 0
        %668 = vmatprep.subr.bf16.mxu0 0
        %669 = vmatpush1.bf16.msra.mxu0 0
        %670 = vmatprep.subr.bf16.mxu0 0
        %671 = vmatpush1.bf16.msra.mxu0 0
        %672 = vmatprep.subr.bf16.mxu0 0
        %673 = vmatpush1.bf16.msra.mxu0 0
        %674 = vmatprep.subr.bf16.mxu0 0
        %675 = vmatpush1.bf16.msra.mxu0 0
        %676 = vmatprep.subr.bf16.mxu0 0
        %677 = vmatpush1.bf16.msra.mxu0 0
        %678 = vmatprep.subr.bf16.mxu0 0
        %679 = vmatpush1.bf16.msra.mxu0 0
        %680 = vmatprep.subr.bf16.mxu0 0
        %681 = vmatpush1.bf16.msra.mxu0 0
        %682 = vmatprep.mubr.bf16.mxu0 0
        %683 = vmatmul.mubr.bf16.gmra.mrb[0].mxu0 %v645
        %v684 = vpop.f32.mrb[0].mxu0
        %v685 = vadd.f32 0.0, %v684
        %v686 = vpop.f32.mrb[0].mxu0
        %v687 = vpop.f32.mrb[0].mxu0
        %v688 = vpop.f32.mrb[0].mxu0
        %689 = vdwg.mxu0
        %690 = vrot.lane.b32.xlu0 %v299, 64
        %v691 = vpop.permute.xlu0 %690
        %v693 = vsel %vm303, %v544, 0
        %v696 = vsel %vm550, %v691, 0
        %698 = vmatprep.subr.bf16.mxu0 0
        %699 = vmatpush1.bf16.msra.mxu0 %v696
        %700 = vmatprep.subr.bf16.mxu0 0
        %701 = vmatpush1.bf16.msra.mxu0 0
        %702 = vmatprep.subr.bf16.mxu0 0
        %703 = vmatpush1.bf16.msra.mxu0 0
        %704 = vmatprep.subr.bf16.mxu0 0
        %705 = vmatpush1.bf16.msra.mxu0 0
        %706 = vmatprep.subr.bf16.mxu0 0
        %707 = vmatpush1.bf16.msra.mxu0 0
        %708 = vmatprep.subr.bf16.mxu0 0
        %709 = vmatpush1.bf16.msra.mxu0 0
        %710 = vmatprep.subr.bf16.mxu0 0
        %711 = vmatpush1.bf16.msra.mxu0 0
        %712 = vmatprep.subr.bf16.mxu0 0
        %713 = vmatpush1.bf16.msra.mxu0 0
        %714 = vmatprep.subr.bf16.mxu0 0
        %715 = vmatpush1.bf16.msra.mxu0 0
        %716 = vmatprep.subr.bf16.mxu0 0
        %717 = vmatpush1.bf16.msra.mxu0 0
        %718 = vmatprep.subr.bf16.mxu0 0
        %719 = vmatpush1.bf16.msra.mxu0 0
        %720 = vmatprep.subr.bf16.mxu0 0
        %721 = vmatpush1.bf16.msra.mxu0 0
        %722 = vmatprep.subr.bf16.mxu0 0
        %723 = vmatpush1.bf16.msra.mxu0 0
        %724 = vmatprep.subr.bf16.mxu0 0
        %725 = vmatpush1.bf16.msra.mxu0 0
        %726 = vmatprep.subr.bf16.mxu0 0
        %727 = vmatpush1.bf16.msra.mxu0 0
        %728 = vmatprep.subr.bf16.mxu0 0
        %729 = vmatpush1.bf16.msra.mxu0 0
        %730 = vmatprep.mubr.bf16.mxu0 0
        %731 = vmatmul.mubr.bf16.gmra.mrb[0].mxu0 %v693
        %v732 = vpop.f32.mrb[0].mxu0
        %v733 = vadd.f32 0.0, %v732
        %v734 = vpop.f32.mrb[0].mxu0
        %v735 = vpop.f32.mrb[0].mxu0
        %v736 = vpop.f32.mrb[0].mxu0
        %737 = vdwg.mxu0
        %739 = vrot.lane.b32.xlu0 %v637, 8
        %v740 = vpop.permute.xlu0 %739
        %743 = vrot.lane.b32.xlu0 %v685, 16
        %v744 = vpop.permute.xlu0 %743
        %747 = vrot.lane.b32.xlu0 %v733, 24
        %v748 = vpop.permute.xlu0 %747
        %v750 = vsel %vm303, %v589, %v740
        %vm751 = vcmask 130048
        %v752 = vsel %vm751, %v750, %v744
        %vm753 = vcmask 195584
        %v754 = vsel %vm753, %v752, %v748
        %755 = vst.msk [vmem:[%s200] sm:$0xff] %vm227, %v754
        %s756 = sand.u32 %s97, 1
        %s757 = scalar_lea.sflag [#allocation4], %s756
        %s758 = sand.u32 %s97, 1
        %s759 = smul.addr %s758, 8
        %s760 = scalar_lea.vmem [#allocation7], %s759
        // Predicated region
        $region41: #{tpu_custom_call.1} parent=31 // pred_check
          %p761 = pneg %p107
        $region42: #{tpu_custom_call.1} parent=31 // pred_check_branch
          %763 = sbr.rel (%p761) target = $region44
        $region43: #{tpu_custom_call.1} parent=31 // pred_region
          %s765 = ssub.s32 128, 128
          %766 = vsyncadd %s757, %s765
          %s767 = smul.addr %s21, 128
          %s768 = scalar_lea.hbm %s3, %s767
          %s770 = sshll.u32 %s760, 4
          %s771 = int_to_ptr.vmem [resolvable:$true] %s770
          %773 = dma.vmem_to_hbm [thread:$0]  %s771, 128, %s768, %s757
        $region44: #{tpu_custom_call.1} parent=31 // pred_fallthru
          _
      $region32: #{tpu_custom_call.1} parent=5 // pred_fallthru
        _
      %p774 = scmp.le.s32.totalorder 2, %s16
      // Predicated region
      $region45: #{tpu_custom_call.1} parent=5 // pred_check
        %p775 = pneg %p774
      $region46: #{tpu_custom_call.1} parent=5 // pred_check_branch
        %777 = sbr.rel (%p775) target = $region48
      $region47: #{tpu_custom_call.1} parent=5 // pred_region
        %s778 = ssub.s32 %s16, 2
        // Predicated region
        $region49: #{tpu_custom_call.1} parent=47 // pred_check
          %p779 = pneg %p113
        $region50: #{tpu_custom_call.1} parent=47 // pred_check_branch
          %781 = sbr.rel (%p779) target = $region52
        $region51: #{tpu_custom_call.1} parent=47 // pred_region
          %s782 = sand.u32 %s98, 1
          %s783 = scalar_lea.sflag [#allocation4], %s782
          %s784 = sand.u32 %s98, 1
          %s785 = smul.addr %s784, 8
          %s786 = scalar_lea.vmem [#allocation7], %s785
          %787 = dma.done %s783, 128
        $region52: #{tpu_custom_call.1} parent=47 // pred_fallthru
          _
      $region48: #{tpu_custom_call.1} parent=5 // pred_fallthru
        _
    $region6: #{tpu_custom_call.1} parent=1 // loop_footer
      %s20 = sadd.s32 1, %s16
    $region7: #{tpu_custom_call.1} parent=1 // loop_footer_branch
      %15 = sbr.rel target = $region3
    $region8: #{tpu_custom_call.1} parent=1 // loop_exit
      _
    %788 = vsyncpa [#allocation3], 1
    %s789 = scalar_lea.sflag [#allocation3], 1
    %790 = vsyncpa %s789, 1
    %791 = vsyncpa [#allocation6], 1
    %792 = vsyncpa [#allocation4], 1
    %s793 = scalar_lea.sflag [#allocation4], 1
    %794 = vsyncpa %s793, 1

</llo_original>
